<compile_context>
chip_gen: v6e
topology: v6e:2x2x1
jax: 0.10.0
libtpu: 0.0.40
codegen_flags: <defaults>
</compile_context>

<pallas_src>
import jax
import jax.numpy as jnp
from jax import lax
from jax.experimental import pallas as pl
from jax.experimental.pallas import tpu as pltpu

LOSS_PARAMS = {
    "loss_single": {"state": True, "weight": 1.0, "dp_pow": 0.5},
    "loss_poissn": {"state": True, "weight": 0.5, "dp_pow": 1.0, "eps": 1e-6},
    "loss_pacbed": {"state": True, "weight": 1.0, "dp_pow": 0.2},
    "loss_sparse": {"state": True, "weight": 0.1, "ln_order": 1},
    "loss_simlar": {"state": True, "weight": 0.2, "obj_type": "both",
                    "blur_std": None, "scale_factor": None},
}

_LANE = 128
_SUB = 8
_TILE = _SUB * _LANE                  # flattened pixel axis padded to whole (8,128) tiles


def _cdiv(a, b):
    return -(-a // b)


def _pow(x, p):
    """Elementwise x**p for non-negative x; exact 0 -> 0 (no -inf/NaN from log)."""
    p = float(p)
    if p == 1.0:
        return x
    if p == 2.0:
        return x * x
    if p == 0.5:
        return jnp.sqrt(x)
    safe = jnp.where(x > 0, x, 1.0)
    return jnp.where(x > 0, jnp.exp(p * jnp.log(safe)), 0.0)


def _tpu_budgets():
    """Per-generation chunking / block-size / VMEM-limit selection."""
    vmem_bytes = None
    kind = ""
    try:
        kind = jax.devices()[0].device_kind.lower()
    except Exception:
        pass
    try:
        info = pltpu.get_tpu_info()
        for name in ("vmem_capacity_bytes", "vmem_bytes", "vmem_size_bytes"):
            v = getattr(info, name, None)
            if v is not None:
                vmem_bytes = int(v)
                break
    except Exception:
        pass
    num_chunks = 2 if "v7" in kind else 1          # leading "parallel" axis only on 2-TC chips
    if vmem_bytes is None:
        vmem_bytes = 64 * 1024 * 1024 if "v7" in kind else 128 * 1024 * 1024
    if vmem_bytes >= 100 * 1024 * 1024:            # v5e / v6e (128 MiB physical VMEM)
        dp_block = 6 * 1024 * 1024                 # per-input block
        obj_block = 12 * 1024 * 1024               # whole object block
        vmem_limit = 64 * 1024 * 1024
    else:                                          # v7x (64 MiB per TC) / unknown
        dp_block = 4 * 1024 * 1024
        obj_block = 8 * 1024 * 1024
        vmem_limit = 40 * 1024 * 1024
    return num_chunks, dp_block, obj_block, vmem_limit


# -----------------------------------------------------------------------------
# Kernel 1: diffraction-pattern losses (single / poissn partial sums + per-pixel
# batch sums for pacbed).  Measured-only transcendental stats live in the wrapper.
# -----------------------------------------------------------------------------
def _make_dp_kernel(ps, pp, eps):
    ps, pp, eps = float(ps), float(pp), float(eps)

    def kernel(m_ref, d_ref, vec_ref, pix_ref):
        @pl.when(pl.program_id(1) == 0)
        def _init():
            vec_ref[...] = jnp.zeros_like(vec_ref)
            pix_ref[...] = jnp.zeros_like(pix_ref)

        TB = m_ref.shape[0]
        R8 = m_ref.shape[1]
        zero = jnp.zeros((_SUB, _LANE), jnp.float32)
        if TB >= 8 and TB % 8 == 0:
            unroll = 8
        elif TB <= 8:
            unroll = True
        else:
            unroll = 1

        def row_body(r, vacc):
            es0, po0 = vacc

            def pat_body(t, carry):
                es, po, pm, pd = carry
                m = m_ref[t, r]                       # (8,128) vreg
                d = d_ref[t, r]
                # loss_single squared error; expanded form needs one sqrt for ps=0.5
                if ps == 0.5:
                    es = es + (m + d - 2.0 * jnp.sqrt(m * d))
                else:
                    es = es + (_pow(m, ps) - _pow(d, ps)) ** 2
                # loss_poissn term
                m_pp = _pow(m, pp)
                d_pp = _pow(d, pp)
                po = po + (d_pp * jnp.log(m_pp + eps) - m_pp)
                # per-pixel batch sums (pacbed)
                pm = pm + m
                pd = pd + d
                return es, po, pm, pd

            es, po, pm, pd = lax.fori_loop(0, TB, pat_body,
                                           (es0, po0, zero, zero), unroll=unroll)
            pix_ref[0, 0, r] += pm
            pix_ref[0, 1, r] += pd
            return es, po

        es, po = lax.fori_loop(0, R8, row_body, (zero, zero))
        vec_ref[0, 0] += es
        vec_ref[0, 1] += po

    return kernel


def _dp_partial_sums(model_DP, measured_DP, loss_params, nc, dp_block, vmem_limit):
    N, H, W = model_DP.shape
    P = H * W
    Ppad = _cdiv(P, _TILE) * _TILE
    R8 = Ppad // _TILE

    ps = float(loss_params["loss_single"].get("dp_pow", 0.5))
    pp = float(loss_params["loss_poissn"].get("dp_pow", 1.0))
    eps = float(loss_params["loss_poissn"].get("eps", 1e-6))

    m2 = model_DP.astype(jnp.float32).reshape(N, P)
    d2 = measured_DP.astype(jnp.float32).reshape(N, P)
    if Ppad != P:
        m2 = jnp.pad(m2, ((0, 0), (0, Ppad - P)))
        d2 = jnp.pad(d2, ((0, 0), (0, Ppad - P)))

    per_pat = Ppad * 4
    TB = max(1, dp_block // per_pat)
    TB = min(TB, _cdiv(N, nc))
    if TB > 8:
        TB = (TB // 8) * 8
    G = _cdiv(N, nc * TB)
    Npad = nc * G * TB
    if Npad != N:
        m2 = jnp.pad(m2, ((0, Npad - N), (0, 0)))
        d2 = jnp.pad(d2, ((0, Npad - N), (0, 0)))
    m4 = m2.reshape(Npad, R8, _SUB, _LANE)
    d4 = d2.reshape(Npad, R8, _SUB, _LANE)

    kernel = _make_dp_kernel(ps, pp, eps)
    vec, pix = pl.pallas_call(
        kernel,
        out_shape=(
            jax.ShapeDtypeStruct((nc, 2, _SUB, _LANE), jnp.float32),
            jax.ShapeDtypeStruct((nc, 2, R8, _SUB, _LANE), jnp.float32),
        ),
        grid=(nc, G),
        in_specs=[
            pl.BlockSpec((TB, R8, _SUB, _LANE), lambda c, i: (c * G + i, 0, 0, 0)),
            pl.BlockSpec((TB, R8, _SUB, _LANE), lambda c, i: (c * G + i, 0, 0, 0)),
        ],
        out_specs=(
            pl.BlockSpec((1, 2, _SUB, _LANE), lambda c, i: (c, 0, 0, 0)),
            pl.BlockSpec((1, 2, R8, _SUB, _LANE), lambda c, i: (c, 0, 0, 0, 0)),
        ),
        compiler_params=pltpu.CompilerParams(
            dimension_semantics=("parallel", "arbitrary"),
            vmem_limit_bytes=vmem_limit,
        ),
    )(m4, d4)
    return vec, pix


# -----------------------------------------------------------------------------
# Kernel 2: object-patch losses (sparse / simlar partial sums).
# Native layout is kept: (N, omode, Z*H*W*2) lane-dense; amplitude (even lanes)
# and phase (odd lanes) are separated with a lane-parity mask in-kernel.
# -----------------------------------------------------------------------------
def _make_obj_kernel(omode, ln):
    ln = float(ln)
    inv_om = 1.0 / float(omode)
    # TODO(synk): for omode == 1 torch's unbiased std(1) is NaN; we return 0 instead.
    inv_nm1 = 1.0 / float(max(omode - 1, 1))

    def kernel(occu_ref, obj_ref, sparse_ref, simlar_ref):
        @pl.when(pl.program_id(1) + pl.program_id(2) == 0)
        def _init():
            sparse_ref[...] = jnp.zeros_like(sparse_ref)
            simlar_ref[...] = jnp.zeros_like(simlar_ref)

        TBo = obj_ref.shape[0]
        TR = obj_ref.shape[2]
        lane = lax.broadcasted_iota(jnp.int32, (_SUB, _LANE), 1)
        is_phase = (lane % 2) == 1                     # odd flat index -> phase channel
        zero = jnp.zeros((_SUB, _LANE), jnp.float32)
        occ = [occu_ref[k] for k in range(omode)]      # SMEM scalars, hoisted

        def row_body(r, carry):
            def pat_body(t, c):
                sp, sa, sph = c
                xs = [obj_ref[t, k, r] for k in range(omode)]   # omode vregs
                # loss_sparse: per-mode sum of |phase| ** ln
                sp = tuple(
                    sp[k] + jnp.where(is_phase, _pow(jnp.abs(xs[k]), ln), 0.0)
                    for k in range(omode))
                # loss_simlar: per-pixel unbiased std across modes of obj * occu
                ws = [xs[k] * occ[k] for k in range(omode)]
                mean = ws[0]
                for k in range(1, omode):
                    mean = mean + ws[k]
                mean = mean * inv_om
                var = (ws[0] - mean) ** 2
                for k in range(1, omode):
                    var = var + (ws[k] - mean) ** 2
                std = jnp.sqrt(var * inv_nm1)
                sa = sa + jnp.where(is_phase, 0.0, std)
                sph = sph + jnp.where(is_phase, std, 0.0)
                return sp, sa, sph

            return lax.fori_loop(0, TBo, pat_body, carry)

        init = (tuple(zero for _ in range(omode)), zero, zero)
        sp, sa, sph = lax.fori_loop(0, TR, row_body, init)
        for k in range(omode):
            sparse_ref[0, k] += sp[k]
        simlar_ref[0, 0] += sa
        simlar_ref[0, 1] += sph

    return kernel


def _obj_partial_sums(object_patches, omode_occu, loss_params, nc, obj_block, vmem_limit):
    Np, omode, Z, Ho, Wo, C = object_patches.shape
    P2 = Z * Ho * Wo * C
    Rn = _cdiv(P2, _TILE)
    ln = loss_params["loss_sparse"]["ln_order"]

    # Block size is bounded by obj_block on both the pixel and patch axes.
    per_pr = omode * _TILE * 4
    TR = min(Rn, max(1, obj_block // per_pr))
    TBo = min(_cdiv(Np, nc), max(1, obj_block // (TR * per_pr)))
    Gr = _cdiv(Rn, TR)
    Gp = _cdiv(Np, nc * TBo)
    Rpad = Gr * TR
    Nppad = nc * Gp * TBo

    obj = object_patches.astype(jnp.float32).reshape(Np, omode, P2)   # free reshape
    if Rpad * _TILE != P2:
        obj = jnp.pad(obj, ((0, 0), (0, 0), (0, Rpad * _TILE - P2)))
    if Nppad != Np:
        obj = jnp.pad(obj, ((0, Nppad - Np), (0, 0), (0, 0)))
    obj = obj.reshape(Nppad, omode, Rpad, _SUB, _LANE)

    occu = omode_occu.astype(jnp.float32).reshape(omode)

    kernel = _make_obj_kernel(omode, ln)
    sparse_out, simlar_out = pl.pallas_call(
        kernel,
        out_shape=(
            jax.ShapeDtypeStruct((nc, omode, _SUB, _LANE), jnp.float32),
            jax.ShapeDtypeStruct((nc, 2, _SUB, _LANE), jnp.float32),
        ),
        grid=(nc, Gp, Gr),
        in_specs=[
            pl.BlockSpec(memory_space=pltpu.MemorySpace.SMEM),
            pl.BlockSpec((TBo, omode, TR, _SUB, _LANE),
                         lambda c, p, r: (c * Gp + p, 0, r, 0, 0)),
        ],
        out_specs=(
            pl.BlockSpec((1, omode, _SUB, _LANE), lambda c, p, r: (c, 0, 0, 0)),
            pl.BlockSpec((1, 2, _SUB, _LANE), lambda c, p, r: (c, 0, 0, 0)),
        ),
        compiler_params=pltpu.CompilerParams(
            dimension_semantics=("parallel", "arbitrary", "arbitrary"),
            vmem_limit_bytes=vmem_limit,
        ),
    )(occu, obj)
    return sparse_out, simlar_out


# -----------------------------------------------------------------------------
# Wrapper: CombinedLoss.forward
# -----------------------------------------------------------------------------
def combined_loss(model_DP, measured_DP, object_patches, omode_occu,
                  loss_params=LOSS_PARAMS):
    N, H, W = model_DP.shape
    Np, omode, Z, Ho, Wo, _C = object_patches.shape
    num_dp = float(N * H * W)
    num_obj = float(Np * Z * Ho * Wo)
    P = H * W

    nc, dp_block, obj_block, vmem_limit = _tpu_budgets()

    ps = float(loss_params["loss_single"].get("dp_pow", 0.5))
    pp = float(loss_params["loss_poissn"].get("dp_pow", 1.0))
    pb = float(loss_params["loss_pacbed"].get("dp_pow", 0.2))

    # Measured-only scalar statistics (model-independent): one fused XLA pass.
    d_f32 = measured_DP.astype(jnp.float32)
    sum_d_ps = jnp.sum(_pow(d_f32, ps))
    sum_d_pp = jnp.sum(_pow(d_f32, pp))
    sum_d_pb = jnp.sum(_pow(d_f32, pb))

    vec, pix = _dp_partial_sums(model_DP, measured_DP, loss_params,
                                nc, dp_block, vmem_limit)
    vec = jnp.sum(vec, axis=(0, 2, 3))                  # (2,) [single sq-err, poissn]
    pix = jnp.sum(pix, axis=0)                          # (2, R8, 8, 128)
    pix_m = pix[0].reshape(-1)[:P]                      # per-pixel batch sums
    pix_d = pix[1].reshape(-1)[:P]

    sparse_out, simlar_out = _obj_partial_sums(object_patches, omode_occu,
                                               loss_params, nc, obj_block, vmem_limit)
    sparse_sums = jnp.sum(sparse_out, axis=(0, 2, 3))   # (omode,)
    simlar_sums = jnp.sum(simlar_out, axis=(0, 2, 3))   # (2,) [amplitude, phase]

    zero = jnp.float32(0.0)

    # loss_single
    sp = loss_params["loss_single"]
    if sp["state"]:
        data_mean = sum_d_ps / num_dp
        mse = vec[0] / num_dp
        loss_single = sp["weight"] * jnp.sqrt(mse) / data_mean
    else:
        loss_single = zero

    # loss_poissn
    pps = loss_params["loss_poissn"]
    if pps["state"]:
        data_mean = sum_d_pp / num_dp
        loss_poissn = pps["weight"] * (-(vec[1] / num_dp)) / data_mean
    else:
        loss_poissn = zero

    # loss_pacbed
    pbs = loss_params["loss_pacbed"]
    if pbs["state"]:
        data_mean = sum_d_pb / num_dp
        mean_m = pix_m / float(N)
        mean_d = pix_d / float(N)
        mse = jnp.mean((_pow(mean_m, pb) - _pow(mean_d, pb)) ** 2)
        loss_pacbed = pbs["weight"] * jnp.sqrt(mse) / data_mean
    else:
        loss_pacbed = zero

    # loss_sparse
    sps = loss_params["loss_sparse"]
    if sps["state"]:
        ln = float(sps["ln_order"])
        sparse_mean = sparse_sums / num_obj
        loss_sparse = sps["weight"] * jnp.sum(
            _pow(sparse_mean, 1.0 / ln) * omode_occu.astype(jnp.float32))
    else:
        loss_sparse = zero

    # loss_simlar
    sms = loss_params["loss_simlar"]
    if sms["state"]:
        # TODO(synk): gaussian_blur / F.interpolate preprocessing (blur_std,
        # scale_factor) branches are not implemented; only None/None is supported.
        temp = zero
        if sms["obj_type"] in ("amplitude", "both"):
            temp = temp + simlar_sums[0] / num_obj
        if sms["obj_type"] in ("phase", "both"):
            temp = temp + simlar_sums[1] / num_obj
        loss_simlar = sms["weight"] * temp
    else:
        loss_simlar = zero

    losses = [loss_single, loss_poissn, loss_pacbed, loss_sparse, loss_simlar]
    total_loss = loss_single + loss_poissn + loss_pacbed + loss_sparse + loss_simlar
    return total_loss, losses


# -----------------------------------------------------------------------------
# Pure-JAX reference (mirrors the PyTorch module) for correctness checking
# -----------------------------------------------------------------------------
def reference_loss(model_DP, measured_DP, object_patches, omode_occu, P=LOSS_PARAMS):
    losses = []
    p = P["loss_single"].get("dp_pow", 0.5)
    dm = jnp.mean(measured_DP ** p)
    losses.append(P["loss_single"]["weight"]
                  * jnp.sqrt(jnp.mean((model_DP ** p - measured_DP ** p) ** 2)) / dm)

    p = P["loss_poissn"].get("dp_pow", 1.0)
    eps = P["loss_poissn"].get("eps", 1e-6)
    dm = jnp.mean(measured_DP ** p)
    losses.append(P["loss_poissn"]["weight"]
                  * (-jnp.mean(measured_DP ** p * jnp.log(model_DP ** p + eps)
                               - model_DP ** p)) / dm)

    p = P["loss_pacbed"].get("dp_pow", 0.2)
    dm = jnp.mean(measured_DP ** p)
    losses.append(P["loss_pacbed"]["weight"]
                  * jnp.sqrt(jnp.mean((jnp.mean(model_DP, 0) ** p
                                       - jnp.mean(measured_DP, 0) ** p) ** 2)) / dm)

    objp = object_patches[..., 1]
    ln = P["loss_sparse"]["ln_order"]
    losses.append(P["loss_sparse"]["weight"]
                  * jnp.sum(jnp.mean(jnp.abs(objp) ** ln, axis=(0, 2, 3, 4)) ** (1.0 / ln)
                            * omode_occu))

    obja = object_patches[..., 0]
    occ = omode_occu[:, None, None, None]
    temp = (jnp.mean(jnp.std(obja * occ, axis=1, ddof=1))
            + jnp.mean(jnp.std(objp * occ, axis=1, ddof=1)))
    losses.append(P["loss_simlar"]["weight"] * temp)
    return sum(losses), losses


if __name__ == "__main__":
    key = jax.random.PRNGKey(0)
    k1, k2, k3 = jax.random.split(key, 3)

    N, H, W = 5, 16, 16
    omode, Z = 3, 3

    model_DP = jax.random.uniform(k1, (N, H, W), jnp.float32, minval=0.1, maxval=2.0)
    measured_DP = jax.random.uniform(k2, (N, H, W), jnp.float32, minval=0.1, maxval=2.0)
    object_patches = jax.random.uniform(k3, (N, omode, Z, H, W, 2), jnp.float32,
                                        minval=-1.0, maxval=1.0)
    omode_occu = jnp.array([0.5, 0.3, 0.2], dtype=jnp.float32)

    total, losses = combined_loss(model_DP, measured_DP, object_patches, omode_occu)
    total = jax.block_until_ready(total)
    losses = [jax.block_until_ready(l) for l in losses]

    total_ref, losses_ref = reference_loss(model_DP, measured_DP, object_patches, omode_occu)
    ok = bool(jnp.allclose(total, total_ref, rtol=1e-3, atol=1e-5))
    for a, b in zip(losses, losses_ref):
        ok = ok and bool(jnp.allclose(a, b, rtol=1e-3, atol=1e-5))
    if not ok:
        raise AssertionError("Pallas CombinedLoss mismatch vs JAX reference")

    print("KERNEL_OK")
</pallas_src>

<mosaic_0001>
module attributes {stable_mosaic.version = 11 : i64} {
  func.func @kernel(%arg0: i32, %arg1: i32, %arg2: memref<5x1x8x128xf32, #tpu.memory_space<vmem>>, %arg3: memref<5x1x8x128xf32, #tpu.memory_space<vmem>>, %arg4: memref<1x2x8x128xf32, #tpu.memory_space<vmem>>, %arg5: memref<1x2x1x8x128xf32, #tpu.memory_space<vmem>>) attributes {dimension_semantics = [#tpu.dimension_semantics<parallel>, #tpu.dimension_semantics<arbitrary>], iteration_bounds = array<i64: 1, 1>, scalar_prefetch = 0 : i64, scratch_operands = 0 : i64, tpu.core_type = #tpu.core_type<tc>, window_params = [{transform_indices = @transform_0, window_bounds = array<i64: 5, 1, 8, 128>}, {transform_indices = @transform_1, window_bounds = array<i64: 5, 1, 8, 128>}, {transform_indices = @transform_2, window_bounds = array<i64: 1, 2, 8, 128>}, {transform_indices = @transform_3, window_bounds = array<i64: 1, 2, 1, 8, 128>}]} {
    %c0_i32 = arith.constant 0 : i32
    %0 = arith.cmpi eq, %arg1, %c0_i32 : i32
    %1 = arith.extui %0 : i1 to i32
    %c0_i32_0 = arith.constant 0 : i32
    %2 = arith.cmpi ne, %1, %c0_i32_0 : i32
    scf.if %2 {
      %cst_64 = arith.constant 0.000000e+00 : f32
      %147 = vector.broadcast %cst_64 : f32 to vector<1x2x8x128xf32>
      %c0_65 = arith.constant 0 : index
      %c0_66 = arith.constant 0 : index
      %c0_67 = arith.constant 0 : index
      %c0_68 = arith.constant 0 : index
      %148 = vector.load %arg4[%c0_65, %c0_66, %c0_67, %c0_68] : memref<1x2x8x128xf32, #tpu.memory_space<vmem>>, vector<1x2x8x128xf32>
      tpu.vector_store %arg4[%c0_65, %c0_66, %c0_67, %c0_68], %147 {strides = array<i32>} : memref<1x2x8x128xf32, #tpu.memory_space<vmem>>, vector<1x2x8x128xf32>,
      %cst_69 = arith.constant 0.000000e+00 : f32
      %149 = vector.broadcast %cst_69 : f32 to vector<1x2x1x8x128xf32>
      %c0_70 = arith.constant 0 : index
      %c0_71 = arith.constant 0 : index
      %c0_72 = arith.constant 0 : index
      %c0_73 = arith.constant 0 : index
      %c0_74 = arith.constant 0 : index
      %150 = vector.load %arg5[%c0_70, %c0_71, %c0_72, %c0_73, %c0_74] : memref<1x2x1x8x128xf32, #tpu.memory_space<vmem>>, vector<1x2x1x8x128xf32>
      tpu.vector_store %arg5[%c0_70, %c0_71, %c0_72, %c0_73, %c0_74], %149 {strides = array<i32>} : memref<1x2x1x8x128xf32, #tpu.memory_space<vmem>>, vector<1x2x1x8x128xf32>,
    } else {
    }
    %cst = arith.constant 0.000000e+00 : f32
    %3 = vector.broadcast %cst : f32 to vector<8x128xf32>
    %c0_i32_1 = arith.constant 0 : i32
    %c0_i32_2 = arith.constant 0 : i32
    %4 = arith.index_cast %c0_i32_2 : i32 to index
    %5 = arith.index_cast %c0_i32_1 : i32 to index
    %c0 = arith.constant 0 : index
    %c0_3 = arith.constant 0 : index
    %6 = vector.load %arg2[%4, %5, %c0, %c0_3] : memref<5x1x8x128xf32, #tpu.memory_space<vmem>>, vector<1x1x8x128xf32>
    %7 = vector.shape_cast %6 : vector<1x1x8x128xf32> to vector<8x128xf32>
    %8 = arith.index_cast %c0_i32_2 : i32 to index
    %9 = arith.index_cast %c0_i32_1 : i32 to index
    %c0_4 = arith.constant 0 : index
    %c0_5 = arith.constant 0 : index
    %10 = vector.load %arg3[%8, %9, %c0_4, %c0_5] : memref<5x1x8x128xf32, #tpu.memory_space<vmem>>, vector<1x1x8x128xf32>
    %11 = vector.shape_cast %10 : vector<1x1x8x128xf32> to vector<8x128xf32>
    %12 = arith.addf %7, %11 : vector<8x128xf32>
    %13 = arith.mulf %7, %11 : vector<8x128xf32>
    %14 = math.sqrt %13 : vector<8x128xf32>
    %cst_6 = arith.constant 2.000000e+00 : f32
    %15 = vector.broadcast %cst_6 : f32 to vector<8x128xf32>
    %16 = arith.mulf %15, %14 : vector<8x128xf32>
    %17 = arith.subf %12, %16 : vector<8x128xf32>
    %18 = arith.addf %3, %17 : vector<8x128xf32>
    %cst_7 = arith.constant 9.99999997E-7 : f32
    %19 = vector.broadcast %cst_7 : f32 to vector<8x128xf32>
    %20 = arith.addf %7, %19 : vector<8x128xf32>
    %21 = math.log %20 : vector<8x128xf32>
    %22 = arith.mulf %11, %21 : vector<8x128xf32>
    %23 = arith.subf %22, %7 : vector<8x128xf32>
    %24 = arith.addf %3, %23 : vector<8x128xf32>
    %25 = arith.addf %3, %7 : vector<8x128xf32>
    %26 = arith.addf %3, %11 : vector<8x128xf32>
    %c1_i32 = arith.constant 1 : i32
    %27 = arith.index_cast %c1_i32 : i32 to index
    %28 = arith.index_cast %c0_i32_1 : i32 to index
    %c0_8 = arith.constant 0 : index
    %c0_9 = arith.constant 0 : index
    %29 = vector.load %arg2[%27, %28, %c0_8, %c0_9] : memref<5x1x8x128xf32, #tpu.memory_space<vmem>>, vector<1x1x8x128xf32>
    %30 = vector.shape_cast %29 : vector<1x1x8x128xf32> to vector<8x128xf32>
    %31 = arith.index_cast %c1_i32 : i32 to index
    %32 = arith.index_cast %c0_i32_1 : i32 to index
    %c0_10 = arith.constant 0 : index
    %c0_11 = arith.constant 0 : index
    %33 = vector.load %arg3[%31, %32, %c0_10, %c0_11] : memref<5x1x8x128xf32, #tpu.memory_space<vmem>>, vector<1x1x8x128xf32>
    %34 = vector.shape_cast %33 : vector<1x1x8x128xf32> to vector<8x128xf32>
    %35 = arith.addf %30, %34 : vector<8x128xf32>
    %36 = arith.mulf %30, %34 : vector<8x128xf32>
    %37 = math.sqrt %36 : vector<8x128xf32>
    %cst_12 = arith.constant 2.000000e+00 : f32
    %38 = vector.broadcast %cst_12 : f32 to vector<8x128xf32>
    %39 = arith.mulf %38, %37 : vector<8x128xf32>
    %40 = arith.subf %35, %39 : vector<8x128xf32>
    %41 = arith.addf %18, %40 : vector<8x128xf32>
    %cst_13 = arith.constant 9.99999997E-7 : f32
    %42 = vector.broadcast %cst_13 : f32 to vector<8x128xf32>
    %43 = arith.addf %30, %42 : vector<8x128xf32>
    %44 = math.log %43 : vector<8x128xf32>
    %45 = arith.mulf %34, %44 : vector<8x128xf32>
    %46 = arith.subf %45, %30 : vector<8x128xf32>
    %47 = arith.addf %24, %46 : vector<8x128xf32>
    %48 = arith.addf %25, %30 : vector<8x128xf32>
    %49 = arith.addf %26, %34 : vector<8x128xf32>
    %c2_i32 = arith.constant 2 : i32
    %50 = arith.index_cast %c2_i32 : i32 to index
    %51 = arith.index_cast %c0_i32_1 : i32 to index
    %c0_14 = arith.constant 0 : index
    %c0_15 = arith.constant 0 : index
    %52 = vector.load %arg2[%50, %51, %c0_14, %c0_15] : memref<5x1x8x128xf32, #tpu.memory_space<vmem>>, vector<1x1x8x128xf32>
    %53 = vector.shape_cast %52 : vector<1x1x8x128xf32> to vector<8x128xf32>
    %54 = arith.index_cast %c2_i32 : i32 to index
    %55 = arith.index_cast %c0_i32_1 : i32 to index
    %c0_16 = arith.constant 0 : index
    %c0_17 = arith.constant 0 : index
    %56 = vector.load %arg3[%54, %55, %c0_16, %c0_17] : memref<5x1x8x128xf32, #tpu.memory_space<vmem>>, vector<1x1x8x128xf32>
    %57 = vector.shape_cast %56 : vector<1x1x8x128xf32> to vector<8x128xf32>
    %58 = arith.addf %53, %57 : vector<8x128xf32>
    %59 = arith.mulf %53, %57 : vector<8x128xf32>
    %60 = math.sqrt %59 : vector<8x128xf32>
    %cst_18 = arith.constant 2.000000e+00 : f32
    %61 = vector.broadcast %cst_18 : f32 to vector<8x128xf32>
    %62 = arith.mulf %61, %60 : vector<8x128xf32>
    %63 = arith.subf %58, %62 : vector<8x128xf32>
    %64 = arith.addf %41, %63 : vector<8x128xf32>
    %cst_19 = arith.constant 9.99999997E-7 : f32
    %65 = vector.broadcast %cst_19 : f32 to vector<8x128xf32>
    %66 = arith.addf %53, %65 : vector<8x128xf32>
    %67 = math.log %66 : vector<8x128xf32>
    %68 = arith.mulf %57, %67 : vector<8x128xf32>
    %69 = arith.subf %68, %53 : vector<8x128xf32>
    %70 = arith.addf %47, %69 : vector<8x128xf32>
    %71 = arith.addf %48, %53 : vector<8x128xf32>
    %72 = arith.addf %49, %57 : vector<8x128xf32>
    %c3_i32 = arith.constant 3 : i32
    %73 = arith.index_cast %c3_i32 : i32 to index
    %74 = arith.index_cast %c0_i32_1 : i32 to index
    %c0_20 = arith.constant 0 : index
    %c0_21 = arith.constant 0 : index
    %75 = vector.load %arg2[%73, %74, %c0_20, %c0_21] : memref<5x1x8x128xf32, #tpu.memory_space<vmem>>, vector<1x1x8x128xf32>
    %76 = vector.shape_cast %75 : vector<1x1x8x128xf32> to vector<8x128xf32>
    %77 = arith.index_cast %c3_i32 : i32 to index
    %78 = arith.index_cast %c0_i32_1 : i32 to index
    %c0_22 = arith.constant 0 : index
    %c0_23 = arith.constant 0 : index
    %79 = vector.load %arg3[%77, %78, %c0_22, %c0_23] : memref<5x1x8x128xf32, #tpu.memory_space<vmem>>, vector<1x1x8x128xf32>
    %80 = vector.shape_cast %79 : vector<1x1x8x128xf32> to vector<8x128xf32>
    %81 = arith.addf %76, %80 : vector<8x128xf32>
    %82 = arith.mulf %76, %80 : vector<8x128xf32>
    %83 = math.sqrt %82 : vector<8x128xf32>
    %cst_24 = arith.constant 2.000000e+00 : f32
    %84 = vector.broadcast %cst_24 : f32 to vector<8x128xf32>
    %85 = arith.mulf %84, %83 : vector<8x128xf32>
    %86 = arith.subf %81, %85 : vector<8x128xf32>
    %87 = arith.addf %64, %86 : vector<8x128xf32>
    %cst_25 = arith.constant 9.99999997E-7 : f32
    %88 = vector.broadcast %cst_25 : f32 to vector<8x128xf32>
    %89 = arith.addf %76, %88 : vector<8x128xf32>
    %90 = math.log %89 : vector<8x128xf32>
    %91 = arith.mulf %80, %90 : vector<8x128xf32>
    %92 = arith.subf %91, %76 : vector<8x128xf32>
    %93 = arith.addf %70, %92 : vector<8x128xf32>
    %94 = arith.addf %71, %76 : vector<8x128xf32>
    %95 = arith.addf %72, %80 : vector<8x128xf32>
    %c4_i32 = arith.constant 4 : i32
    %96 = arith.index_cast %c4_i32 : i32 to index
    %97 = arith.index_cast %c0_i32_1 : i32 to index
    %c0_26 = arith.constant 0 : index
    %c0_27 = arith.constant 0 : index
    %98 = vector.load %arg2[%96, %97, %c0_26, %c0_27] : memref<5x1x8x128xf32, #tpu.memory_space<vmem>>, vector<1x1x8x128xf32>
    %99 = vector.shape_cast %98 : vector<1x1x8x128xf32> to vector<8x128xf32>
    %100 = arith.index_cast %c4_i32 : i32 to index
    %101 = arith.index_cast %c0_i32_1 : i32 to index
    %c0_28 = arith.constant 0 : index
    %c0_29 = arith.constant 0 : index
    %102 = vector.load %arg3[%100, %101, %c0_28, %c0_29] : memref<5x1x8x128xf32, #tpu.memory_space<vmem>>, vector<1x1x8x128xf32>
    %103 = vector.shape_cast %102 : vector<1x1x8x128xf32> to vector<8x128xf32>
    %104 = arith.addf %99, %103 : vector<8x128xf32>
    %105 = arith.mulf %99, %103 : vector<8x128xf32>
    %106 = math.sqrt %105 : vector<8x128xf32>
    %cst_30 = arith.constant 2.000000e+00 : f32
    %107 = vector.broadcast %cst_30 : f32 to vector<8x128xf32>
    %108 = arith.mulf %107, %106 : vector<8x128xf32>
    %109 = arith.subf %104, %108 : vector<8x128xf32>
    %110 = arith.addf %87, %109 : vector<8x128xf32>
    %cst_31 = arith.constant 9.99999997E-7 : f32
    %111 = vector.broadcast %cst_31 : f32 to vector<8x128xf32>
    %112 = arith.addf %99, %111 : vector<8x128xf32>
    %113 = math.log %112 : vector<8x128xf32>
    %114 = arith.mulf %103, %113 : vector<8x128xf32>
    %115 = arith.subf %114, %99 : vector<8x128xf32>
    %116 = arith.addf %93, %115 : vector<8x128xf32>
    %117 = arith.addf %94, %99 : vector<8x128xf32>
    %118 = arith.addf %95, %103 : vector<8x128xf32>
    %c5_i32 = arith.constant 5 : i32
    %c0_32 = arith.constant 0 : index
    %c0_33 = arith.constant 0 : index
    %119 = arith.index_cast %c0_i32_1 : i32 to index
    %c0_34 = arith.constant 0 : index
    %c0_35 = arith.constant 0 : index
    %120 = vector.load %arg5[%c0_32, %c0_33, %119, %c0_34, %c0_35] : memref<1x2x1x8x128xf32, #tpu.memory_space<vmem>>, vector<1x1x1x8x128xf32>
    %121 = vector.shape_cast %120 : vector<1x1x1x8x128xf32> to vector<8x128xf32>
    %122 = arith.addf %121, %117 : vector<8x128xf32>
    %c0_36 = arith.constant 0 : index
    %c0_37 = arith.constant 0 : index
    %123 = arith.index_cast %c0_i32_1 : i32 to index
    %c0_38 = arith.constant 0 : index
    %c0_39 = arith.constant 0 : index
    %124 = vector.load %arg5[%c0_36, %c0_37, %123, %c0_38, %c0_39] : memref<1x2x1x8x128xf32, #tpu.memory_space<vmem>>, vector<1x1x1x8x128xf32>
    %125 = vector.shape_cast %124 : vector<1x1x1x8x128xf32> to vector<8x128xf32>
    %126 = vector.shape_cast %122 : vector<8x128xf32> to vector<1x1x1x8x128xf32>
    tpu.vector_store %arg5[%c0_36, %c0_37, %123, %c0_38, %c0_39], %126 {strides = array<i32>} : memref<1x2x1x8x128xf32, #tpu.memory_space<vmem>>, vector<1x1x1x8x128xf32>,
    %c0_40 = arith.constant 0 : index
    %c1 = arith.constant 1 : index
    %127 = arith.index_cast %c0_i32_1 : i32 to index
    %c0_41 = arith.constant 0 : index
    %c0_42 = arith.constant 0 : index
    %128 = vector.load %arg5[%c0_40, %c1, %127, %c0_41, %c0_42] : memref<1x2x1x8x128xf32, #tpu.memory_space<vmem>>, vector<1x1x1x8x128xf32>
    %129 = vector.shape_cast %128 : vector<1x1x1x8x128xf32> to vector<8x128xf32>
    %130 = arith.addf %129, %118 : vector<8x128xf32>
    %c0_43 = arith.constant 0 : index
    %c1_44 = arith.constant 1 : index
    %131 = arith.index_cast %c0_i32_1 : i32 to index
    %c0_45 = arith.constant 0 : index
    %c0_46 = arith.constant 0 : index
    %132 = vector.load %arg5[%c0_43, %c1_44, %131, %c0_45, %c0_46] : memref<1x2x1x8x128xf32, #tpu.memory_space<vmem>>, vector<1x1x1x8x128xf32>
    %133 = vector.shape_cast %132 : vector<1x1x1x8x128xf32> to vector<8x128xf32>
    %134 = vector.shape_cast %130 : vector<8x128xf32> to vector<1x1x1x8x128xf32>
    tpu.vector_store %arg5[%c0_43, %c1_44, %131, %c0_45, %c0_46], %134 {strides = array<i32>} : memref<1x2x1x8x128xf32, #tpu.memory_space<vmem>>, vector<1x1x1x8x128xf32>,
    %c1_i32_47 = arith.constant 1 : i32
    %c0_48 = arith.constant 0 : index
    %c0_49 = arith.constant 0 : index
    %c0_50 = arith.constant 0 : index
    %c0_51 = arith.constant 0 : index
    %135 = vector.load %arg4[%c0_48, %c0_49, %c0_50, %c0_51] : memref<1x2x8x128xf32, #tpu.memory_space<vmem>>, vector<1x1x8x128xf32>
    %136 = vector.shape_cast %135 : vector<1x1x8x128xf32> to vector<8x128xf32>
    %137 = arith.addf %136, %110 : vector<8x128xf32>
    %c0_52 = arith.constant 0 : index
    %c0_53 = arith.constant 0 : index
    %c0_54 = arith.constant 0 : index
    %c0_55 = arith.constant 0 : index
    %138 = vector.load %arg4[%c0_52, %c0_53, %c0_54, %c0_55] : memref<1x2x8x128xf32, #tpu.memory_space<vmem>>, vector<1x1x8x128xf32>
    %139 = vector.shape_cast %138 : vector<1x1x8x128xf32> to vector<8x128xf32>
    %140 = vector.shape_cast %137 : vector<8x128xf32> to vector<1x1x8x128xf32>
    tpu.vector_store %arg4[%c0_52, %c0_53, %c0_54, %c0_55], %140 {strides = array<i32>} : memref<1x2x8x128xf32, #tpu.memory_space<vmem>>, vector<1x1x8x128xf32>,
    %c0_56 = arith.constant 0 : index
    %c1_57 = arith.constant 1 : index
    %c0_58 = arith.constant 0 : index
    %c0_59 = arith.constant 0 : index
    %141 = vector.load %arg4[%c0_56, %c1_57, %c0_58, %c0_59] : memref<1x2x8x128xf32, #tpu.memory_space<vmem>>, vector<1x1x8x128xf32>
    %142 = vector.shape_cast %141 : vector<1x1x8x128xf32> to vector<8x128xf32>
    %143 = arith.addf %142, %116 : vector<8x128xf32>
    %c0_60 = arith.constant 0 : index
    %c1_61 = arith.constant 1 : index
    %c0_62 = arith.constant 0 : index
    %c0_63 = arith.constant 0 : index
    %144 = vector.load %arg4[%c0_60, %c1_61, %c0_62, %c0_63] : memref<1x2x8x128xf32, #tpu.memory_space<vmem>>, vector<1x1x8x128xf32>
    %145 = vector.shape_cast %144 : vector<1x1x8x128xf32> to vector<8x128xf32>
    %146 = vector.shape_cast %143 : vector<8x128xf32> to vector<1x1x8x128xf32>
    tpu.vector_store %arg4[%c0_60, %c1_61, %c0_62, %c0_63], %146 {strides = array<i32>} : memref<1x2x8x128xf32, #tpu.memory_space<vmem>>, vector<1x1x8x128xf32>,
    return
  }
  func.func @transform_0(%arg0: i32, %arg1: i32) -> (i32, i32, i32, i32) {
    %c1_i32 = arith.constant 1 : i32
    %0 = arith.muli %arg0, %c1_i32 : i32
    %1 = arith.addi %0, %arg1 : i32
    %c0_i32 = arith.constant 0 : i32
    %c0_i32_0 = arith.constant 0 : i32
    %c0_i32_1 = arith.constant 0 : i32
    %c0_i32_2 = arith.constant 0 : i32
    return %1, %c0_i32, %c0_i32_0, %c0_i32_1 : i32, i32, i32, i32
  }
  func.func @transform_1(%arg0: i32, %arg1: i32) -> (i32, i32, i32, i32) {
    %c1_i32 = arith.constant 1 : i32
    %0 = arith.muli %arg0, %c1_i32 : i32
    %1 = arith.addi %0, %arg1 : i32
    %c0_i32 = arith.constant 0 : i32
    %c0_i32_0 = arith.constant 0 : i32
    %c0_i32_1 = arith.constant 0 : i32
    %c0_i32_2 = arith.constant 0 : i32
    return %1, %c0_i32, %c0_i32_0, %c0_i32_1 : i32, i32, i32, i32
  }
  func.func @transform_2(%arg0: i32, %arg1: i32) -> (i32, i32, i32, i32) {
    %c0_i32 = arith.constant 0 : i32
    %c0_i32_0 = arith.constant 0 : i32
    %c0_i32_1 = arith.constant 0 : i32
    %c0_i32_2 = arith.constant 0 : i32
    return %arg0, %c0_i32, %c0_i32_0, %c0_i32_1 : i32, i32, i32, i32
  }
  func.func @transform_3(%arg0: i32, %arg1: i32) -> (i32, i32, i32, i32, i32) {
    %c0_i32 = arith.constant 0 : i32
    %c0_i32_0 = arith.constant 0 : i32
    %c0_i32_1 = arith.constant 0 : i32
    %c0_i32_2 = arith.constant 0 : i32
    %c0_i32_3 = arith.constant 0 : i32
    return %arg0, %c0_i32, %c0_i32_0, %c0_i32_1, %c0_i32_2 : i32, i32, i32, i32, i32
  }
}

</mosaic_0001>

<llo_original>
// kernel: tpu_custom_call.1
$region0: #{tpu_custom_call.1}
  #allocation0 [shape = 'u32[]', space=smem, size = 0x4, offset = 0x4, fixed_abs, tag = 'smem constant byte address 0x4 - core index']
  #allocation1 [shape = 'u32[144,128]{1,0:T(1,128)}', space=vmem, size = 0x12000, scoped, tag = 'internal scratch']
  %s0 = inlined_call_operand.hbm [shape: f32[5,1,8,128], index: 0, kind: input, shape index: {}]
  %s1 = inlined_call_operand.hbm [shape: f32[5,1,8,128], index: 1, kind: input, shape index: {}]
  %s2 = inlined_call_operand.hbm [shape: f32[1,2,8,128], index: 2, kind: output, shape index: {0}]
  %s3 = inlined_call_operand.hbm [shape: f32[1,2,1,8,128], index: 3, kind: output, shape index: {1}]
  %4 = xla_tuple %s2, %s3
  %s5 = sld [smem:[#allocation0]]
  $region38: #{tpu_custom_call.1} parent=0
    _
  %s7 = ssub.s32 1, %s5
  %s8 = scalar_select 0, %s7, %s5
  $region1: #{tpu_custom_call.1} parent=0
    #allocation2 [shape = 'u8[20480]{0}', space=vmem, size = 0x5000, scoped, tag = 'input window, operand 0, single buffered']
    #allocation3 [shape = 's32[1]{0}', space=sflag, size = 0x4, scoped, tag = 'scoped memory for tpu_custom_call.1']
    #allocation4 [shape = 's32[1]{0}', space=sflag, size = 0x4, scoped, tag = 'scoped memory for tpu_custom_call.1']
    #allocation5 [shape = 'u8[20480]{0}', space=vmem, size = 0x5000, scoped, tag = 'input window, operand 1, single buffered']
    #allocation6 [shape = 's32[1]{0}', space=sflag, size = 0x4, scoped, tag = 'scoped memory for tpu_custom_call.1']
    #allocation7 [shape = 'u8[8192]{0}', space=vmem, size = 0x2000, scoped, tag = 'output window, operand 0, single buffered']
    #allocation8 [shape = 'u8[8192]{0}', space=vmem, size = 0x2000, scoped, tag = 'output window, operand 1, single buffered']
    #allocation9 [shape = 's32[1]{0}', space=sflag, size = 0x4, scoped, tag = 'scoped memory for tpu_custom_call.1']
    %9 = vsyncpa [#allocation3], 0
    %10 = vsyncpa [#allocation6], 0
    %11 = vsyncpa [#allocation4], 0
    %12 = vsyncpa [#allocation9], 0
    // Predicated region
    $region2: #{tpu_custom_call.1} parent=1 // pred_check
      _
    $region3: #{tpu_custom_call.1} parent=1 // pred_check_branch
      %14 = sbr.rel (0) target = $region5
    $region4: #{tpu_custom_call.1} parent=1 // pred_region
      %s15 = sadd.s32 0, 0
      %s16 = smul.u32 5, %s15
      %s18 = ssub.s32 640, 640
      %19 = vsyncadd [#allocation3], %s18
      %s20 = smul.addr %s16, 128
      %s21 = scalar_lea.hbm %s0, %s20
      %s22 = sshll.u32 [#allocation2], 4
      %s23 = int_to_ptr.vmem [resolvable:$true] %s22
      %28 = dma.hbm_to_vmem [thread:$0]  %s21, 640, %s23, [#allocation3], 128, 128, 8
    $region5: #{tpu_custom_call.1} parent=1 // pred_fallthru
      _
    // Predicated region
    $region6: #{tpu_custom_call.1} parent=1 // pred_check
      _
    $region7: #{tpu_custom_call.1} parent=1 // pred_check_branch
      %30 = sbr.rel (0) target = $region9
    $region8: #{tpu_custom_call.1} parent=1 // pred_region
      %s31 = sadd.s32 0, 0
      %s32 = smul.u32 5, %s31
      %s34 = ssub.s32 640, 640
      %35 = vsyncadd [#allocation6], %s34
      %s36 = smul.addr %s32, 128
      %s37 = scalar_lea.hbm %s1, %s36
      %s38 = sshll.u32 [#allocation5], 4
      %s39 = int_to_ptr.vmem [resolvable:$true] %s38
      %44 = dma.hbm_to_vmem [thread:$0]  %s37, 640, %s39, [#allocation6], 128, 128, 8
    $region9: #{tpu_custom_call.1} parent=1 // pred_fallthru
      _
    // Predicated region
    $region10: #{tpu_custom_call.1} parent=1 // pred_check
      _
    $region11: #{tpu_custom_call.1} parent=1 // pred_check_branch
      %46 = sbr.rel (0) target = $region13
    $region12: #{tpu_custom_call.1} parent=1 // pred_region
      %47 = dma.done [#allocation3], 640
    $region13: #{tpu_custom_call.1} parent=1 // pred_fallthru
      _
    // Predicated region
    $region14: #{tpu_custom_call.1} parent=1 // pred_check
      _
    $region15: #{tpu_custom_call.1} parent=1 // pred_check_branch
      %49 = sbr.rel (0) target = $region17
    $region16: #{tpu_custom_call.1} parent=1 // pred_region
      %50 = dma.done [#allocation6], 640
    $region17: #{tpu_custom_call.1} parent=1 // pred_fallthru
      _
    %s51 = sadd.s32 0, 0
    %s52 = smul.u32 5, %s51
    %s53 = sadd.s32 0, 0
    %s54 = smul.u32 5, %s53
    %p55 = scmp.eq.s32.totalorder 0, 0
    // Predicated region
    $region18: #{tpu_custom_call.1} parent=1 // pred_check
      %p56 = pneg %p55
    $region19: #{tpu_custom_call.1} parent=1 // pred_check_branch
      %58 = sbr.rel (%p56) target = $region21
    $region20: #{tpu_custom_call.1} parent=1 // pred_region
      %59 = vst [vmem:[#allocation7] sm:$0xff] 0.0
      %60 = vst [vmem:[#allocation7 + $0x8] sm:$0xff] 0.0
      %61 = vst [vmem:[#allocation8] sm:$0xff] 0.0
      %62 = vst [vmem:[#allocation8 + $0x8] sm:$0xff] 0.0
    $region21: #{tpu_custom_call.1} parent=1 // pred_fallthru
      _
    %v63 = vld [vmem:[#allocation2] sm:$0xff]
    %v64 = vld [vmem:[#allocation5] sm:$0xff]
    %v65 = vadd.f32 %v63, %v64
    %v66 = vmul.f32 %v63, %v64
    %v67 = vrsqrt.pop %v66
    %v68 = vmul.f32 %v66, %v67
    %vm69 = vcmp.eq.f32.partialorder %v66, inf
    %v70 = vsel %vm69, %v66, %v68
    %vm71 = vcmp.eq.f32.partialorder %v66, 0.0
    %v72 = vand.u32 %v66, 2147483648
    %v73 = vsel %vm71, %v72, %v70
    %v74 = vmul.f32 %v73, 2.0
    %v75 = vsub.f32 %v65, %v74
    %v76 = vadd.f32 %v75, 0.0
    %v77 = vadd.f32 %v63, 1e-06
    %v78 = vlog2.pop %v77
    %v79 = vmul.f32 %v78, 0.6931472
    %v80 = vmul.f32 %v64, %v79
    %v81 = vsub.f32 %v80, %v63
    %v82 = vadd.f32 %v81, 0.0
    %v83 = vadd.f32 %v63, 0.0
    %v84 = vadd.f32 %v64, 0.0
    %s85 = scalar_lea.vmem [#allocation2], 8
    %v86 = vld [vmem:[%s85] sm:$0xff]
    %s87 = scalar_lea.vmem [#allocation5], 8
    %v88 = vld [vmem:[%s87] sm:$0xff]
    %v89 = vadd.f32 %v86, %v88
    %v90 = vmul.f32 %v86, %v88
    %v91 = vrsqrt.pop %v90
    %v92 = vmul.f32 %v90, %v91
    %vm93 = vcmp.eq.f32.partialorder %v90, inf
    %v94 = vsel %vm93, %v90, %v92
    %vm95 = vcmp.eq.f32.partialorder %v90, 0.0
    %v96 = vand.u32 %v90, 2147483648
    %v97 = vsel %vm95, %v96, %v94
    %v98 = vmul.f32 %v97, 2.0
    %v99 = vsub.f32 %v89, %v98
    %v100 = vadd.f32 %v76, %v99
    %v101 = vadd.f32 %v86, 1e-06
    %v102 = vlog2.pop %v101
    %v103 = vmul.f32 %v102, 0.6931472
    %v104 = vmul.f32 %v88, %v103
    %v105 = vsub.f32 %v104, %v86
    %v106 = vadd.f32 %v82, %v105
    %v107 = vadd.f32 %v83, %v86
    %v108 = vadd.f32 %v84, %v88
    %s109 = scalar_lea.vmem [#allocation2], 16
    %v110 = vld [vmem:[%s109] sm:$0xff]
    %s111 = scalar_lea.vmem [#allocation5], 16
    %v112 = vld [vmem:[%s111] sm:$0xff]
    %v113 = vadd.f32 %v110, %v112
    %v114 = vmul.f32 %v110, %v112
    %v115 = vrsqrt.pop %v114
    %v116 = vmul.f32 %v114, %v115
    %vm117 = vcmp.eq.f32.partialorder %v114, inf
    %v118 = vsel %vm117, %v114, %v116
    %vm119 = vcmp.eq.f32.partialorder %v114, 0.0
    %v120 = vand.u32 %v114, 2147483648
    %v121 = vsel %vm119, %v120, %v118
    %v122 = vmul.f32 %v121, 2.0
    %v123 = vsub.f32 %v113, %v122
    %v124 = vadd.f32 %v100, %v123
    %v125 = vadd.f32 %v110, 1e-06
    %v126 = vlog2.pop %v125
    %v127 = vmul.f32 %v126, 0.6931472
    %v128 = vmul.f32 %v112, %v127
    %v129 = vsub.f32 %v128, %v110
    %v130 = vadd.f32 %v106, %v129
    %v131 = vadd.f32 %v107, %v110
    %v132 = vadd.f32 %v108, %v112
    %s133 = scalar_lea.vmem [#allocation2], 24
    %v134 = vld [vmem:[%s133] sm:$0xff]
    %s135 = scalar_lea.vmem [#allocation5], 24
    %v136 = vld [vmem:[%s135] sm:$0xff]
    %v137 = vadd.f32 %v134, %v136
    %v138 = vmul.f32 %v134, %v136
    %v139 = vrsqrt.pop %v138
    %v140 = vmul.f32 %v138, %v139
    %vm141 = vcmp.eq.f32.partialorder %v138, inf
    %v142 = vsel %vm141, %v138, %v140
    %vm143 = vcmp.eq.f32.partialorder %v138, 0.0
    %v144 = vand.u32 %v138, 2147483648
    %v145 = vsel %vm143, %v144, %v142
    %v146 = vmul.f32 %v145, 2.0
    %v147 = vsub.f32 %v137, %v146
    %v148 = vadd.f32 %v124, %v147
    %v149 = vadd.f32 %v134, 1e-06
    %v150 = vlog2.pop %v149
    %v151 = vmul.f32 %v150, 0.6931472
    %v152 = vmul.f32 %v136, %v151
    %v153 = vsub.f32 %v152, %v134
    %v154 = vadd.f32 %v130, %v153
    %v155 = vadd.f32 %v131, %v134
    %v156 = vadd.f32 %v132, %v136
    %s157 = scalar_lea.vmem [#allocation2], 32
    %v158 = vld [vmem:[%s157] sm:$0xff]
    %s159 = scalar_lea.vmem [#allocation5], 32
    %v160 = vld [vmem:[%s159] sm:$0xff]
    %v161 = vadd.f32 %v158, %v160
    %v162 = vmul.f32 %v158, %v160
    %v163 = vrsqrt.pop %v162
    %v164 = vmul.f32 %v162, %v163
    %vm165 = vcmp.eq.f32.partialorder %v162, inf
    %v166 = vsel %vm165, %v162, %v164
    %vm167 = vcmp.eq.f32.partialorder %v162, 0.0
    %v168 = vand.u32 %v162, 2147483648
    %v169 = vsel %vm167, %v168, %v166
    %v170 = vmul.f32 %v169, 2.0
    %v171 = vsub.f32 %v161, %v170
    %v172 = vadd.f32 %v148, %v171
    %v173 = vadd.f32 %v158, 1e-06
    %v174 = vlog2.pop %v173
    %v175 = vmul.f32 %v174, 0.6931472
    %v176 = vmul.f32 %v160, %v175
    %v177 = vsub.f32 %v176, %v158
    %v178 = vadd.f32 %v154, %v177
    %v179 = vadd.f32 %v155, %v158
    %v180 = vadd.f32 %v156, %v160
    %v181 = vld [vmem:[#allocation8] sm:$0xff]
    %v182 = vadd.f32 %v181, %v179
    %183 = vst [vmem:[#allocation8] sm:$0xff] %v182
    %s184 = scalar_lea.vmem [#allocation8], 8
    %v185 = vld [vmem:[%s184] sm:$0xff]
    %v186 = vadd.f32 %v185, %v180
    %187 = vst [vmem:[%s184] sm:$0xff] %v186
    %v188 = vld [vmem:[#allocation7] sm:$0xff]
    %v189 = vadd.f32 %v188, %v172
    %190 = vst [vmem:[#allocation7] sm:$0xff] %v189
    %s191 = scalar_lea.vmem [#allocation7], 8
    %v192 = vld [vmem:[%s191] sm:$0xff]
    %v193 = vadd.f32 %v192, %v178
    %194 = vst [vmem:[%s191] sm:$0xff] %v193
    // Predicated region
    $region22: #{tpu_custom_call.1} parent=1 // pred_check
      _
    $region23: #{tpu_custom_call.1} parent=1 // pred_check_branch
      %196 = sbr.rel (0) target = $region25
    $region24: #{tpu_custom_call.1} parent=1 // pred_region
      %s198 = ssub.s32 256, 256
      %199 = vsyncadd [#allocation4], %s198
      %s200 = sshll.u32 [#allocation7], 4
      %s201 = int_to_ptr.vmem [resolvable:$true] %s200
      %206 = dma.vmem_to_hbm [thread:$0]  %s201, 256, %s2, [#allocation4], 128, 128, 8
    $region25: #{tpu_custom_call.1} parent=1 // pred_fallthru
      _
    // Predicated region
    $region26: #{tpu_custom_call.1} parent=1 // pred_check
      _
    $region27: #{tpu_custom_call.1} parent=1 // pred_check_branch
      %208 = sbr.rel (0) target = $region29
    $region28: #{tpu_custom_call.1} parent=1 // pred_region
      %s210 = ssub.s32 256, 256
      %211 = vsyncadd [#allocation9], %s210
      %s212 = sshll.u32 [#allocation8], 4
      %s213 = int_to_ptr.vmem [resolvable:$true] %s212
      %218 = dma.vmem_to_hbm [thread:$0]  %s213, 256, %s3, [#allocation9], 128, 128, 8
    $region29: #{tpu_custom_call.1} parent=1 // pred_fallthru
      _
    // Predicated region
    $region30: #{tpu_custom_call.1} parent=1 // pred_check
      _
    $region31: #{tpu_custom_call.1} parent=1 // pred_check_branch
      %220 = sbr.rel (0) target = $region33
    $region32: #{tpu_custom_call.1} parent=1 // pred_region
      %221 = dma.done [#allocation4], 256
    $region33: #{tpu_custom_call.1} parent=1 // pred_fallthru
      _
    // Predicated region
    $region34: #{tpu_custom_call.1} parent=1 // pred_check
      _
    $region35: #{tpu_custom_call.1} parent=1 // pred_check_branch
      %223 = sbr.rel (0) target = $region37
    $region36: #{tpu_custom_call.1} parent=1 // pred_region
      %224 = dma.done [#allocation9], 256
    $region37: #{tpu_custom_call.1} parent=1 // pred_fallthru
      _
    %225 = vsyncpa [#allocation3], 1
    %226 = vsyncpa [#allocation6], 1
    %227 = vsyncpa [#allocation4], 1
    %228 = vsyncpa [#allocation9], 1

</llo_original>
